<compile_context>
chip_gen: v6e
topology: v6e:2x2x1
jax: 0.10.0
libtpu: 0.0.40
codegen_flags: <defaults>
</compile_context>

<pallas_src>
import functools
import math

import jax
import jax.numpy as jnp
from jax.experimental import pallas as pl
from jax.experimental.pallas import tpu as pltpu


# ----------------------------------------------------------------------------
# Buffer construction (mirrors the PyTorch __init__ exactly)
# ----------------------------------------------------------------------------
def make_positional_encoding(d_model: int, max_len: int = 5000) -> jnp.ndarray:
    position = jnp.arange(max_len, dtype=jnp.float32)[:, None]              # [max_len, 1]
    div_term = jnp.exp(
        jnp.arange(0, d_model, 2, dtype=jnp.float32) * (-math.log(10000.0) / d_model)
    )
    pe = jnp.zeros((max_len, 1, d_model), dtype=jnp.float32)
    pe = pe.at[:, 0, 0::2].set(jnp.sin(position * div_term))
    pe = pe.at[:, 0, 1::2].set(jnp.cos(position * div_term)[:, :-1])
    return pe


# ----------------------------------------------------------------------------
# Pallas kernels (row-dense [TR, D] tiles)
# ----------------------------------------------------------------------------
def _pe_add_kernel(x_ref, pe_ref, o_ref):
    # eval mode / p == 0: out = x + pe  (implicit elementwise, no broadcasts)
    o_ref[...] = (x_ref[...] + pe_ref[...]).astype(o_ref.dtype)


def _pe_add_dropout_kernel(x_ref, pe_ref, bits_ref, o_ref, *, threshold: int, scale: float):
    # train mode: inverted dropout via a single signed-int32 threshold compare.
    y = x_ref[...] + pe_ref[...]
    keep = bits_ref[...] < jnp.int32(threshold)
    o_ref[...] = jnp.where(keep, y * jnp.float32(scale), jnp.float32(0.0)).astype(o_ref.dtype)


# ----------------------------------------------------------------------------
# Wrapper
# ----------------------------------------------------------------------------
def _row_tile(rows: int, d: int, itemsize: int, budget_bytes: int = 2 * 1024 * 1024) -> int:
    """Rows per tile: multiple of 8 that divides `rows`, ~budget_bytes per operand tile."""
    if rows % 8 != 0:
        return rows                      # single block; block dim == full array dim
    max_rows = max(8, budget_bytes // max(1, d * itemsize))
    tr = min(rows, (max_rows // 8) * 8)
    tr = max(tr, 8)
    while rows % tr != 0:
        tr -= 8
    return tr


def positional_encoding_forward(x, pe, *, p: float = 0.1, training: bool = True,
                                rng_key=None, row_tile: int | None = None):
    """x: [seq_len, batch, d_model]; pe: [max_len, 1, d_model]."""
    S, B, D = x.shape
    R = S * B

    # Collapse (S, B) -> rows; replicate pe over batch so tiles are row-aligned.
    x2 = x.reshape(R, D)
    pe2 = jnp.broadcast_to(pe[:S], (S, B, D)).reshape(R, D).astype(x.dtype)

    if row_tile is not None:
        assert R % row_tile == 0 and (row_tile % 8 == 0 or row_tile == R), "bad row_tile"
        TR = row_tile
    else:
        TR = _row_tile(R, D, x.dtype.itemsize)

    grid = (R // TR,)
    spec = pl.BlockSpec((TR, D), lambda i: (i, 0))
    cparams = pltpu.CompilerParams(
        dimension_semantics=("parallel",),          # shard rows across TCs (v7x megacore)
        vmem_limit_bytes=32 * 1024 * 1024,
    )

    apply_dropout = training and p > 0.0
    if apply_dropout:
        # TODO(synk): the on-chip PRNG (pltpu.prng_seed / prng_random_bits) would avoid
        # streaming the mask bits from HBM, but it has no interpret/CPU lowering in this
        # environment, so the bits are drawn with jax.random outside the kernel.
        if rng_key is None:
            rng_key = jax.random.PRNGKey(0)
        bits_u32 = jax.random.bits(rng_key, (R, D), dtype=jnp.uint32)
        bits_i32 = jax.lax.bitcast_convert_type(bits_u32, jnp.int32)
        # keep iff uniform-int32 < t, with P(keep) = 1 - p  =>  t = (1-p)*2^32 - 2^31
        threshold = int(round((1.0 - p) * float(2 ** 32))) - 2 ** 31
        threshold = max(min(threshold, 2 ** 31 - 1), -(2 ** 31))
        kernel = functools.partial(_pe_add_dropout_kernel,
                                   threshold=threshold, scale=1.0 / (1.0 - p))
        out2 = pl.pallas_call(
            kernel,
            out_shape=jax.ShapeDtypeStruct((R, D), x.dtype),
            grid=grid,
            in_specs=[spec, spec, spec],
            out_specs=spec,
            compiler_params=cparams,
        )(x2, pe2, bits_i32)
    else:
        out2 = pl.pallas_call(
            _pe_add_kernel,
            out_shape=jax.ShapeDtypeStruct((R, D), x.dtype),
            grid=grid,
            in_specs=[spec, spec],
            out_specs=spec,
            compiler_params=cparams,
        )(x2, pe2)

    return out2.reshape(S, B, D)


# ----------------------------------------------------------------------------
# Demo / checks
# ----------------------------------------------------------------------------
if __name__ == "__main__":
    d_model = 33          # must be odd for this module (see note above)
    max_len = 128
    seq_len = 8
    batch = 2
    dropout_p = 0.1

    key = jax.random.PRNGKey(0)
    kx, kd = jax.random.split(key)
    x = jax.random.normal(kx, (seq_len, batch, d_model), dtype=jnp.float32)
    pe = make_positional_encoding(d_model, max_len)

    # --- eval mode (dropout = identity): exact semantics of x + pe[:S] ---
    out_eval = positional_encoding_forward(x, pe, p=dropout_p, training=False)
    out_eval = jax.block_until_ready(out_eval)
    ref_eval = x + pe[:seq_len]
    assert out_eval.shape == (seq_len, batch, d_model)
    assert jnp.allclose(out_eval, ref_eval, atol=1e-6), "eval-mode mismatch"

    # --- train mode (inverted dropout with deterministic key) ---
    out_train = positional_encoding_forward(x, pe, p=dropout_p, training=True, rng_key=kd)
    out_train = jax.block_until_ready(out_train)
    assert out_train.shape == (seq_len, batch, d_model)
    scaled = ref_eval / (1.0 - dropout_p)
    kept = out_train != 0.0
    ok_vals = jnp.where(kept, jnp.isclose(out_train, scaled, atol=1e-5, rtol=1e-5), True)
    assert bool(jnp.all(ok_vals)), "train-mode dropout scaling mismatch"
    keep_frac = float(jnp.mean(kept.astype(jnp.float32)))
    assert abs(keep_frac - (1.0 - dropout_p)) < 0.12, f"keep fraction off: {keep_frac}"

    # --- multi-tile grid exercise (row_tile < total rows -> grid of 4) ---
    seq2, batch2 = 64, 4
    x_big = jax.random.normal(kx, (seq2, batch2, d_model), dtype=jnp.float32)
    out_big = positional_encoding_forward(x_big, pe, p=dropout_p, training=False, row_tile=64)
    out_big = jax.block_until_ready(out_big)
    assert jnp.allclose(out_big, x_big + pe[:seq2], atol=1e-6), "tiled eval mismatch"

    print("KERNEL_OK")
</pallas_src>

<mosaic_0001>
module attributes {stable_mosaic.version = 11 : i64} {
  func.func @_pe_add_kernel(%arg0: i32, %arg1: memref<16x33xf32, #tpu.memory_space<vmem>>, %arg2: memref<16x33xf32, #tpu.memory_space<vmem>>, %arg3: memref<16x33xf32, #tpu.memory_space<vmem>>) attributes {dimension_semantics = [#tpu.dimension_semantics<parallel>], iteration_bounds = array<i64: 1>, scalar_prefetch = 0 : i64, scratch_operands = 0 : i64, tpu.core_type = #tpu.core_type<tc>, window_params = [{transform_indices = @transform_0, window_bounds = array<i64: 16, 33>}, {transform_indices = @transform_1, window_bounds = array<i64: 16, 33>}, {transform_indices = @transform_2, window_bounds = array<i64: 16, 33>}]} {
    %c0 = arith.constant 0 : index
    %c0_0 = arith.constant 0 : index
    %0 = vector.load %arg1[%c0, %c0_0] : memref<16x33xf32, #tpu.memory_space<vmem>>, vector<16x33xf32>
    %c0_1 = arith.constant 0 : index
    %c0_2 = arith.constant 0 : index
    %1 = vector.load %arg2[%c0_1, %c0_2] : memref<16x33xf32, #tpu.memory_space<vmem>>, vector<16x33xf32>
    %2 = arith.addf %0, %1 : vector<16x33xf32>
    %c0_3 = arith.constant 0 : index
    %c0_4 = arith.constant 0 : index
    %3 = vector.load %arg3[%c0_3, %c0_4] : memref<16x33xf32, #tpu.memory_space<vmem>>, vector<16x33xf32>
    tpu.vector_store %arg3[%c0_3, %c0_4], %2 {strides = array<i32>} : memref<16x33xf32, #tpu.memory_space<vmem>>, vector<16x33xf32>,
    return
  }
  func.func @transform_0(%arg0: i32) -> (i32, i32) {
    %c0_i32 = arith.constant 0 : i32
    %c0_i32_0 = arith.constant 0 : i32
    return %arg0, %c0_i32 : i32, i32
  }
  func.func @transform_1(%arg0: i32) -> (i32, i32) {
    %c0_i32 = arith.constant 0 : i32
    %c0_i32_0 = arith.constant 0 : i32
    return %arg0, %c0_i32 : i32, i32
  }
  func.func @transform_2(%arg0: i32) -> (i32, i32) {
    %c0_i32 = arith.constant 0 : i32
    %c0_i32_0 = arith.constant 0 : i32
    return %arg0, %c0_i32 : i32, i32
  }
}

</mosaic_0001>

<llo_original>
// kernel: tpu_custom_call.1
$region0: #{tpu_custom_call.1}
  #allocation0 [shape = 'u32[]', space=smem, size = 0x4, offset = 0x4, fixed_abs, tag = 'smem constant byte address 0x4 - core index']
  #allocation1 [shape = 'u32[144,128]{1,0:T(1,128)}', space=vmem, size = 0x12000, scoped, tag = 'internal scratch']
  %s0 = inlined_call_operand.hbm [shape: f32[16,33], index: 0, kind: input, shape index: {}]
  %s1 = inlined_call_operand.hbm [shape: f32[16,33], index: 1, kind: input, shape index: {}]
  %s2 = inlined_call_operand.hbm [shape: f32[16,33], index: 2, kind: output, shape index: {}]
  %s3 = sld [smem:[#allocation0]]
  $region26: #{tpu_custom_call.1} parent=0
    _
  %s5 = ssub.s32 1, %s3
  %s6 = scalar_select 0, %s5, %s3
  $region1: #{tpu_custom_call.1} parent=0
    #allocation2 [shape = 'u8[8192]{0}', space=vmem, size = 0x2000, scoped, tag = 'input window, operand 0, single buffered']
    #allocation3 [shape = 's32[1]{0}', space=sflag, size = 0x4, scoped, tag = 'scoped memory for tpu_custom_call.1']
    #allocation4 [shape = 's32[1]{0}', space=sflag, size = 0x4, scoped, tag = 'scoped memory for tpu_custom_call.1']
    #allocation5 [shape = 'u8[8192]{0}', space=vmem, size = 0x2000, scoped, tag = 'input window, operand 1, single buffered']
    #allocation6 [shape = 's32[1]{0}', space=sflag, size = 0x4, scoped, tag = 'scoped memory for tpu_custom_call.1']
    #allocation7 [shape = 'u8[8192]{0}', space=vmem, size = 0x2000, scoped, tag = 'output window, operand 0, single buffered']
    %7 = vsyncpa [#allocation3], 0
    %8 = vsyncpa [#allocation6], 0
    %9 = vsyncpa [#allocation4], 0
    // Predicated region
    $region2: #{tpu_custom_call.1} parent=1 // pred_check
      _
    $region3: #{tpu_custom_call.1} parent=1 // pred_check_branch
      %11 = sbr.rel (0) target = $region5
    $region4: #{tpu_custom_call.1} parent=1 // pred_region
      %s13 = ssub.s32 256, 256
      %14 = vsyncadd [#allocation3], %s13
      %s15 = sshll.u32 [#allocation2], 4
      %s16 = int_to_ptr.vmem [resolvable:$true] %s15
      %21 = dma.hbm_to_vmem [thread:$0]  %s0, 256, %s16, [#allocation3], 128, 128, 8
    $region5: #{tpu_custom_call.1} parent=1 // pred_fallthru
      _
    // Predicated region
    $region6: #{tpu_custom_call.1} parent=1 // pred_check
      _
    $region7: #{tpu_custom_call.1} parent=1 // pred_check_branch
      %23 = sbr.rel (0) target = $region9
    $region8: #{tpu_custom_call.1} parent=1 // pred_region
      %s25 = ssub.s32 256, 256
      %26 = vsyncadd [#allocation6], %s25
      %s27 = sshll.u32 [#allocation5], 4
      %s28 = int_to_ptr.vmem [resolvable:$true] %s27
      %33 = dma.hbm_to_vmem [thread:$0]  %s1, 256, %s28, [#allocation6], 128, 128, 8
    $region9: #{tpu_custom_call.1} parent=1 // pred_fallthru
      _
    // Predicated region
    $region10: #{tpu_custom_call.1} parent=1 // pred_check
      _
    $region11: #{tpu_custom_call.1} parent=1 // pred_check_branch
      %35 = sbr.rel (0) target = $region13
    $region12: #{tpu_custom_call.1} parent=1 // pred_region
      %36 = dma.done [#allocation3], 256
    $region13: #{tpu_custom_call.1} parent=1 // pred_fallthru
      _
    // Predicated region
    $region14: #{tpu_custom_call.1} parent=1 // pred_check
      _
    $region15: #{tpu_custom_call.1} parent=1 // pred_check_branch
      %38 = sbr.rel (0) target = $region17
    $region16: #{tpu_custom_call.1} parent=1 // pred_region
      %39 = dma.done [#allocation6], 256
    $region17: #{tpu_custom_call.1} parent=1 // pred_fallthru
      _
    %v40 = vld [vmem:[#allocation2] sm:$0xff]
    %v41 = vld [vmem:[#allocation2 + $0x8] sm:$0xff]
    %v42 = vld [vmem:[#allocation5] sm:$0xff]
    %v43 = vld [vmem:[#allocation5 + $0x8] sm:$0xff]
    %v44 = vadd.f32 %v40, %v42
    %v45 = vadd.f32 %v41, %v43
    %vm46 = vcmask 269312
    %47 = vst.msk [vmem:[#allocation7] sm:$0xff] %vm46, %v44
    %48 = vst.msk [vmem:[#allocation7 + $0x8] sm:$0xff] %vm46, %v45
    // Predicated region
    $region18: #{tpu_custom_call.1} parent=1 // pred_check
      _
    $region19: #{tpu_custom_call.1} parent=1 // pred_check_branch
      %50 = sbr.rel (0) target = $region21
    $region20: #{tpu_custom_call.1} parent=1 // pred_region
      %s52 = ssub.s32 256, 256
      %53 = vsyncadd [#allocation4], %s52
      %s54 = sshll.u32 [#allocation7], 4
      %s55 = int_to_ptr.vmem [resolvable:$true] %s54
      %60 = dma.vmem_to_hbm [thread:$0]  %s55, 256, %s2, [#allocation4], 128, 128, 8
    $region21: #{tpu_custom_call.1} parent=1 // pred_fallthru
      _
    // Predicated region
    $region22: #{tpu_custom_call.1} parent=1 // pred_check
      _
    $region23: #{tpu_custom_call.1} parent=1 // pred_check_branch
      %62 = sbr.rel (0) target = $region25
    $region24: #{tpu_custom_call.1} parent=1 // pred_region
      %63 = dma.done [#allocation4], 256
    $region25: #{tpu_custom_call.1} parent=1 // pred_fallthru
      _
    %64 = vsyncpa [#allocation3], 1
    %65 = vsyncpa [#allocation6], 1
    %66 = vsyncpa [#allocation4], 1

</llo_original>
